<compile_context>
chip_gen: v7x
topology: tpu7x:2x2x1
jax: 0.10.0
libtpu: 0.0.40
codegen_flags: <defaults>
</compile_context>

<pallas_src>
import functools

import jax
import jax.numpy as jnp
from jax.experimental import pallas as pl
from jax.experimental.pallas import tpu as pltpu

LANES = 128


def _round_up(n, m):
    return ((n + m - 1) // m) * m


def pack_policy_params(w1, b1, w2, b2, wv, bv):
    """Packs all linear params into one lane-dense (ROWS, 128) f32 slab.

    Row layout (S = state_space, H = hidden, A = action_space):
      rows [0, S)        : W1 rows               (lanes 0:H)
      row  S             : b1                    (lanes 0:H)
      rows [S+1, S+1+H)  : fused head weights    (lanes 0:A = W2, lane A = Wv)
      row  S+1+H         : fused head bias       (lanes 0:A = b2, lane A = bv)
    All weights are stored (in_features, out_features), i.e. PyTorch weight.T.
    """
    S, H = w1.shape
    A = w2.shape[1]
    rows = _round_up(S + H + 2, 8)
    slab = jnp.zeros((rows, LANES), jnp.float32)
    slab = slab.at[0:S, 0:H].set(w1)
    slab = slab.at[S, 0:H].set(b1)
    slab = slab.at[S + 1:S + 1 + H, 0:A].set(w2)
    slab = slab.at[S + 1:S + 1 + H, A].set(wv[:, 0])
    slab = slab.at[S + 1 + H, 0:A].set(b2)
    slab = slab.at[S + 1 + H, A].set(bv[0])
    return slab


def _policy_kernel(x_ref, p_ref, out_ref, *, state_space, hidden):
    S, H = state_space, hidden
    x = x_ref[...]                                    # (B, S)

    # fc1 + ReLU as VPU broadcast-FMAs (skip the MXU at these shapes).
    acc = p_ref[S:S + 1, :]                           # b1 row, (1, 128)
    for k in range(S):                                # unrolled, S is tiny
        acc = acc + x[:, k:k + 1] * p_ref[k:k + 1, :]
    h = jnp.maximum(acc, 0.0)                         # (B, 128); lanes >= H are 0

    # Fused heads (action_mean | value) in one accumulation over hidden.
    base = S + 1
    out = p_ref[base + H:base + H + 1, :]             # fused head bias row
    for k in range(H):
        out = out + h[:, k:k + 1] * p_ref[base + k:base + k + 1, :]

    out_ref[...] = out                                # single lane-dense store


def policy_forward(x, packed_params, sigma_param, *, state_space, hidden,
                   action_space):
    """Policy forward. Returns (action_mean, sigma, value).

    The torch.distributions.Normal object has no Pallas equivalent; its
    parameters (loc=action_mean, scale=sigma) are returned instead.
    """
    B = x.shape[0]
    kernel = functools.partial(_policy_kernel, state_space=state_space,
                               hidden=hidden)
    vmem = pl.BlockSpec(memory_space=pltpu.MemorySpace.VMEM)

    flops = 2 * B * (state_space * hidden + hidden * (action_space + 1))
    bytes_accessed = 4 * (x.size + packed_params.size + B * LANES)

    out = pl.pallas_call(
        kernel,
        out_shape=jax.ShapeDtypeStruct((B, LANES), jnp.float32),
        in_specs=[vmem, vmem],
        out_specs=vmem,
        cost_estimate=pl.CostEstimate(flops=flops, transcendentals=0,
                                      bytes_accessed=bytes_accessed),
    )(x, packed_params)

    action_mean = out[:, :action_space]
    value = out[:, action_space:action_space + 1]
    # softplus(sigma) is independent of x; compute once outside the kernel.
    sigma = jax.nn.softplus(sigma_param)
    return action_mean, sigma, value


if __name__ == "__main__":
    state_space, action_space, hidden = 4, 2, 16
    batch = 2

    key = jax.random.PRNGKey(0)
    kx, k1, k2, k3 = jax.random.split(key, 4)

    x = jax.random.normal(kx, (batch, state_space), dtype=jnp.float32)

    # Mirrors Policy.init_weights(): normal_(weight), zeros_(bias), sigma=10.0.
    # Weights are stored (in, out) = PyTorch weight.T.
    w1 = jax.random.normal(k1, (state_space, hidden), dtype=jnp.float32)
    b1 = jnp.zeros((hidden,), dtype=jnp.float32)
    w2 = jax.random.normal(k2, (hidden, action_space), dtype=jnp.float32)
    b2 = jnp.zeros((action_space,), dtype=jnp.float32)
    wv = jax.random.normal(k3, (hidden, 1), dtype=jnp.float32)
    bv = jnp.zeros((1,), dtype=jnp.float32)
    sigma_param = jnp.array([10.0], dtype=jnp.float32)

    packed = pack_policy_params(w1, b1, w2, b2, wv, bv)

    action_mean, sigma, value = policy_forward(
        x, packed, sigma_param,
        state_space=state_space, hidden=hidden, action_space=action_space)
    jax.block_until_ready((action_mean, sigma, value))

    # Pure-JAX reference check of the same math.
    h_ref = jnp.maximum(x @ w1 + b1, 0.0)
    mean_ref = h_ref @ w2 + b2
    value_ref = h_ref @ wv + bv
    sigma_ref = jax.nn.softplus(sigma_param)
    assert jnp.allclose(action_mean, mean_ref, atol=1e-5)
    assert jnp.allclose(value, value_ref, atol=1e-5)
    assert jnp.allclose(sigma, sigma_ref, atol=1e-5)

    # TODO(synk): torch.distributions.Normal construction has no Pallas
    # equivalent; (loc=action_mean, scale=sigma) parameters are returned.
    print("KERNEL_OK")
</pallas_src>

<mosaic_0001>
module attributes {stable_mosaic.version = 11 : i64} {
  func.func @_policy_kernel(%arg0: memref<2x4xf32, #tpu.memory_space<vmem>>, %arg1: memref<24x128xf32, #tpu.memory_space<vmem>>, %arg2: memref<2x128xf32, #tpu.memory_space<vmem>>) attributes {dimension_semantics = [], scalar_prefetch = 0 : i64, scratch_operands = 0 : i64, tpu.core_type = #tpu.core_type<tc>} {
    %c0 = arith.constant 0 : index
    %c0_0 = arith.constant 0 : index
    %0 = vector.load %arg0[%c0, %c0_0] : memref<2x4xf32, #tpu.memory_space<vmem>>, vector<2x4xf32>
    %c4 = arith.constant 4 : index
    %c0_1 = arith.constant 0 : index
    %1 = vector.load %arg1[%c4, %c0_1] : memref<24x128xf32, #tpu.memory_space<vmem>>, vector<1x128xf32>
    %2 = vector.extract_strided_slice %0 {offsets = [0, 0], sizes = [2, 1], strides = [1, 1]} : vector<2x4xf32> to vector<2x1xf32>
    %c0_2 = arith.constant 0 : index
    %c0_3 = arith.constant 0 : index
    %3 = vector.load %arg1[%c0_2, %c0_3] : memref<24x128xf32, #tpu.memory_space<vmem>>, vector<1x128xf32>
    %4 = vector.broadcast %2 : vector<2x1xf32> to vector<2x128xf32>
    %5 = vector.broadcast %3 : vector<1x128xf32> to vector<2x128xf32>
    %6 = arith.mulf %4, %5 : vector<2x128xf32>
    %7 = vector.broadcast %1 : vector<1x128xf32> to vector<2x128xf32>
    %8 = arith.addf %7, %6 : vector<2x128xf32>
    %9 = vector.extract_strided_slice %0 {offsets = [0, 1], sizes = [2, 1], strides = [1, 1]} : vector<2x4xf32> to vector<2x1xf32>
    %c1 = arith.constant 1 : index
    %c0_4 = arith.constant 0 : index
    %10 = vector.load %arg1[%c1, %c0_4] : memref<24x128xf32, #tpu.memory_space<vmem>>, vector<1x128xf32>
    %11 = vector.broadcast %9 : vector<2x1xf32> to vector<2x128xf32>
    %12 = vector.broadcast %10 : vector<1x128xf32> to vector<2x128xf32>
    %13 = arith.mulf %11, %12 : vector<2x128xf32>
    %14 = arith.addf %8, %13 : vector<2x128xf32>
    %15 = vector.extract_strided_slice %0 {offsets = [0, 2], sizes = [2, 1], strides = [1, 1]} : vector<2x4xf32> to vector<2x1xf32>
    %c2 = arith.constant 2 : index
    %c0_5 = arith.constant 0 : index
    %16 = vector.load %arg1[%c2, %c0_5] : memref<24x128xf32, #tpu.memory_space<vmem>>, vector<1x128xf32>
    %17 = vector.broadcast %15 : vector<2x1xf32> to vector<2x128xf32>
    %18 = vector.broadcast %16 : vector<1x128xf32> to vector<2x128xf32>
    %19 = arith.mulf %17, %18 : vector<2x128xf32>
    %20 = arith.addf %14, %19 : vector<2x128xf32>
    %21 = vector.extract_strided_slice %0 {offsets = [0, 3], sizes = [2, 1], strides = [1, 1]} : vector<2x4xf32> to vector<2x1xf32>
    %c3 = arith.constant 3 : index
    %c0_6 = arith.constant 0 : index
    %22 = vector.load %arg1[%c3, %c0_6] : memref<24x128xf32, #tpu.memory_space<vmem>>, vector<1x128xf32>
    %23 = vector.broadcast %21 : vector<2x1xf32> to vector<2x128xf32>
    %24 = vector.broadcast %22 : vector<1x128xf32> to vector<2x128xf32>
    %25 = arith.mulf %23, %24 : vector<2x128xf32>
    %26 = arith.addf %20, %25 : vector<2x128xf32>
    %cst = arith.constant 0.000000e+00 : f32
    %27 = vector.broadcast %cst : f32 to vector<2x128xf32>
    %28 = arith.maximumf %26, %27 : vector<2x128xf32>
    %c21 = arith.constant 21 : index
    %c0_7 = arith.constant 0 : index
    %29 = vector.load %arg1[%c21, %c0_7] : memref<24x128xf32, #tpu.memory_space<vmem>>, vector<1x128xf32>
    %30 = vector.extract_strided_slice %28 {offsets = [0, 0], sizes = [2, 1], strides = [1, 1]} : vector<2x128xf32> to vector<2x1xf32>
    %c5 = arith.constant 5 : index
    %c0_8 = arith.constant 0 : index
    %31 = vector.load %arg1[%c5, %c0_8] : memref<24x128xf32, #tpu.memory_space<vmem>>, vector<1x128xf32>
    %32 = vector.broadcast %30 : vector<2x1xf32> to vector<2x128xf32>
    %33 = vector.broadcast %31 : vector<1x128xf32> to vector<2x128xf32>
    %34 = arith.mulf %32, %33 : vector<2x128xf32>
    %35 = vector.broadcast %29 : vector<1x128xf32> to vector<2x128xf32>
    %36 = arith.addf %35, %34 : vector<2x128xf32>
    %37 = vector.extract_strided_slice %28 {offsets = [0, 1], sizes = [2, 1], strides = [1, 1]} : vector<2x128xf32> to vector<2x1xf32>
    %c6 = arith.constant 6 : index
    %c0_9 = arith.constant 0 : index
    %38 = vector.load %arg1[%c6, %c0_9] : memref<24x128xf32, #tpu.memory_space<vmem>>, vector<1x128xf32>
    %39 = vector.broadcast %37 : vector<2x1xf32> to vector<2x128xf32>
    %40 = vector.broadcast %38 : vector<1x128xf32> to vector<2x128xf32>
    %41 = arith.mulf %39, %40 : vector<2x128xf32>
    %42 = arith.addf %36, %41 : vector<2x128xf32>
    %43 = vector.extract_strided_slice %28 {offsets = [0, 2], sizes = [2, 1], strides = [1, 1]} : vector<2x128xf32> to vector<2x1xf32>
    %c7 = arith.constant 7 : index
    %c0_10 = arith.constant 0 : index
    %44 = vector.load %arg1[%c7, %c0_10] : memref<24x128xf32, #tpu.memory_space<vmem>>, vector<1x128xf32>
    %45 = vector.broadcast %43 : vector<2x1xf32> to vector<2x128xf32>
    %46 = vector.broadcast %44 : vector<1x128xf32> to vector<2x128xf32>
    %47 = arith.mulf %45, %46 : vector<2x128xf32>
    %48 = arith.addf %42, %47 : vector<2x128xf32>
    %49 = vector.extract_strided_slice %28 {offsets = [0, 3], sizes = [2, 1], strides = [1, 1]} : vector<2x128xf32> to vector<2x1xf32>
    %c8 = arith.constant 8 : index
    %c0_11 = arith.constant 0 : index
    %50 = vector.load %arg1[%c8, %c0_11] : memref<24x128xf32, #tpu.memory_space<vmem>>, vector<1x128xf32>
    %51 = vector.broadcast %49 : vector<2x1xf32> to vector<2x128xf32>
    %52 = vector.broadcast %50 : vector<1x128xf32> to vector<2x128xf32>
    %53 = arith.mulf %51, %52 : vector<2x128xf32>
    %54 = arith.addf %48, %53 : vector<2x128xf32>
    %55 = vector.extract_strided_slice %28 {offsets = [0, 4], sizes = [2, 1], strides = [1, 1]} : vector<2x128xf32> to vector<2x1xf32>
    %c9 = arith.constant 9 : index
    %c0_12 = arith.constant 0 : index
    %56 = vector.load %arg1[%c9, %c0_12] : memref<24x128xf32, #tpu.memory_space<vmem>>, vector<1x128xf32>
    %57 = vector.broadcast %55 : vector<2x1xf32> to vector<2x128xf32>
    %58 = vector.broadcast %56 : vector<1x128xf32> to vector<2x128xf32>
    %59 = arith.mulf %57, %58 : vector<2x128xf32>
    %60 = arith.addf %54, %59 : vector<2x128xf32>
    %61 = vector.extract_strided_slice %28 {offsets = [0, 5], sizes = [2, 1], strides = [1, 1]} : vector<2x128xf32> to vector<2x1xf32>
    %c10 = arith.constant 10 : index
    %c0_13 = arith.constant 0 : index
    %62 = vector.load %arg1[%c10, %c0_13] : memref<24x128xf32, #tpu.memory_space<vmem>>, vector<1x128xf32>
    %63 = vector.broadcast %61 : vector<2x1xf32> to vector<2x128xf32>
    %64 = vector.broadcast %62 : vector<1x128xf32> to vector<2x128xf32>
    %65 = arith.mulf %63, %64 : vector<2x128xf32>
    %66 = arith.addf %60, %65 : vector<2x128xf32>
    %67 = vector.extract_strided_slice %28 {offsets = [0, 6], sizes = [2, 1], strides = [1, 1]} : vector<2x128xf32> to vector<2x1xf32>
    %c11 = arith.constant 11 : index
    %c0_14 = arith.constant 0 : index
    %68 = vector.load %arg1[%c11, %c0_14] : memref<24x128xf32, #tpu.memory_space<vmem>>, vector<1x128xf32>
    %69 = vector.broadcast %67 : vector<2x1xf32> to vector<2x128xf32>
    %70 = vector.broadcast %68 : vector<1x128xf32> to vector<2x128xf32>
    %71 = arith.mulf %69, %70 : vector<2x128xf32>
    %72 = arith.addf %66, %71 : vector<2x128xf32>
    %73 = vector.extract_strided_slice %28 {offsets = [0, 7], sizes = [2, 1], strides = [1, 1]} : vector<2x128xf32> to vector<2x1xf32>
    %c12 = arith.constant 12 : index
    %c0_15 = arith.constant 0 : index
    %74 = vector.load %arg1[%c12, %c0_15] : memref<24x128xf32, #tpu.memory_space<vmem>>, vector<1x128xf32>
    %75 = vector.broadcast %73 : vector<2x1xf32> to vector<2x128xf32>
    %76 = vector.broadcast %74 : vector<1x128xf32> to vector<2x128xf32>
    %77 = arith.mulf %75, %76 : vector<2x128xf32>
    %78 = arith.addf %72, %77 : vector<2x128xf32>
    %79 = vector.extract_strided_slice %28 {offsets = [0, 8], sizes = [2, 1], strides = [1, 1]} : vector<2x128xf32> to vector<2x1xf32>
    %c13 = arith.constant 13 : index
    %c0_16 = arith.constant 0 : index
    %80 = vector.load %arg1[%c13, %c0_16] : memref<24x128xf32, #tpu.memory_space<vmem>>, vector<1x128xf32>
    %81 = vector.broadcast %79 : vector<2x1xf32> to vector<2x128xf32>
    %82 = vector.broadcast %80 : vector<1x128xf32> to vector<2x128xf32>
    %83 = arith.mulf %81, %82 : vector<2x128xf32>
    %84 = arith.addf %78, %83 : vector<2x128xf32>
    %85 = vector.extract_strided_slice %28 {offsets = [0, 9], sizes = [2, 1], strides = [1, 1]} : vector<2x128xf32> to vector<2x1xf32>
    %c14 = arith.constant 14 : index
    %c0_17 = arith.constant 0 : index
    %86 = vector.load %arg1[%c14, %c0_17] : memref<24x128xf32, #tpu.memory_space<vmem>>, vector<1x128xf32>
    %87 = vector.broadcast %85 : vector<2x1xf32> to vector<2x128xf32>
    %88 = vector.broadcast %86 : vector<1x128xf32> to vector<2x128xf32>
    %89 = arith.mulf %87, %88 : vector<2x128xf32>
    %90 = arith.addf %84, %89 : vector<2x128xf32>
    %91 = vector.extract_strided_slice %28 {offsets = [0, 10], sizes = [2, 1], strides = [1, 1]} : vector<2x128xf32> to vector<2x1xf32>
    %c15 = arith.constant 15 : index
    %c0_18 = arith.constant 0 : index
    %92 = vector.load %arg1[%c15, %c0_18] : memref<24x128xf32, #tpu.memory_space<vmem>>, vector<1x128xf32>
    %93 = vector.broadcast %91 : vector<2x1xf32> to vector<2x128xf32>
    %94 = vector.broadcast %92 : vector<1x128xf32> to vector<2x128xf32>
    %95 = arith.mulf %93, %94 : vector<2x128xf32>
    %96 = arith.addf %90, %95 : vector<2x128xf32>
    %97 = vector.extract_strided_slice %28 {offsets = [0, 11], sizes = [2, 1], strides = [1, 1]} : vector<2x128xf32> to vector<2x1xf32>
    %c16 = arith.constant 16 : index
    %c0_19 = arith.constant 0 : index
    %98 = vector.load %arg1[%c16, %c0_19] : memref<24x128xf32, #tpu.memory_space<vmem>>, vector<1x128xf32>
    %99 = vector.broadcast %97 : vector<2x1xf32> to vector<2x128xf32>
    %100 = vector.broadcast %98 : vector<1x128xf32> to vector<2x128xf32>
    %101 = arith.mulf %99, %100 : vector<2x128xf32>
    %102 = arith.addf %96, %101 : vector<2x128xf32>
    %103 = vector.extract_strided_slice %28 {offsets = [0, 12], sizes = [2, 1], strides = [1, 1]} : vector<2x128xf32> to vector<2x1xf32>
    %c17 = arith.constant 17 : index
    %c0_20 = arith.constant 0 : index
    %104 = vector.load %arg1[%c17, %c0_20] : memref<24x128xf32, #tpu.memory_space<vmem>>, vector<1x128xf32>
    %105 = vector.broadcast %103 : vector<2x1xf32> to vector<2x128xf32>
    %106 = vector.broadcast %104 : vector<1x128xf32> to vector<2x128xf32>
    %107 = arith.mulf %105, %106 : vector<2x128xf32>
    %108 = arith.addf %102, %107 : vector<2x128xf32>
    %109 = vector.extract_strided_slice %28 {offsets = [0, 13], sizes = [2, 1], strides = [1, 1]} : vector<2x128xf32> to vector<2x1xf32>
    %c18 = arith.constant 18 : index
    %c0_21 = arith.constant 0 : index
    %110 = vector.load %arg1[%c18, %c0_21] : memref<24x128xf32, #tpu.memory_space<vmem>>, vector<1x128xf32>
    %111 = vector.broadcast %109 : vector<2x1xf32> to vector<2x128xf32>
    %112 = vector.broadcast %110 : vector<1x128xf32> to vector<2x128xf32>
    %113 = arith.mulf %111, %112 : vector<2x128xf32>
    %114 = arith.addf %108, %113 : vector<2x128xf32>
    %115 = vector.extract_strided_slice %28 {offsets = [0, 14], sizes = [2, 1], strides = [1, 1]} : vector<2x128xf32> to vector<2x1xf32>
    %c19 = arith.constant 19 : index
    %c0_22 = arith.constant 0 : index
    %116 = vector.load %arg1[%c19, %c0_22] : memref<24x128xf32, #tpu.memory_space<vmem>>, vector<1x128xf32>
    %117 = vector.broadcast %115 : vector<2x1xf32> to vector<2x128xf32>
    %118 = vector.broadcast %116 : vector<1x128xf32> to vector<2x128xf32>
    %119 = arith.mulf %117, %118 : vector<2x128xf32>
    %120 = arith.addf %114, %119 : vector<2x128xf32>
    %121 = vector.extract_strided_slice %28 {offsets = [0, 15], sizes = [2, 1], strides = [1, 1]} : vector<2x128xf32> to vector<2x1xf32>
    %c20 = arith.constant 20 : index
    %c0_23 = arith.constant 0 : index
    %122 = vector.load %arg1[%c20, %c0_23] : memref<24x128xf32, #tpu.memory_space<vmem>>, vector<1x128xf32>
    %123 = vector.broadcast %121 : vector<2x1xf32> to vector<2x128xf32>
    %124 = vector.broadcast %122 : vector<1x128xf32> to vector<2x128xf32>
    %125 = arith.mulf %123, %124 : vector<2x128xf32>
    %126 = arith.addf %120, %125 : vector<2x128xf32>
    %c0_24 = arith.constant 0 : index
    %c0_25 = arith.constant 0 : index
    %127 = vector.load %arg2[%c0_24, %c0_25] : memref<2x128xf32, #tpu.memory_space<vmem>>, vector<2x128xf32>
    tpu.vector_store %arg2[%c0_24, %c0_25], %126 {strides = array<i32>} : memref<2x128xf32, #tpu.memory_space<vmem>>, vector<2x128xf32>,
    return
  }
}

</mosaic_0001>

<llo_original>
// kernel: tpu_custom_call.1
$region0: #{tpu_custom_call.1}
  #allocation0 [shape = 'u32[]', space=smem, size = 0x4, offset = 0x4, fixed_abs, tag = 'smem constant byte address 0x4 - core index']
  #allocation1 [shape = 'u32[144,128]{1,0:T(1,128)}', space=vmem, size = 0x12000, scoped, tag = 'internal scratch']
  %s0 = inlined_call_operand.hbm [shape: f32[2,4], index: 0, kind: input, shape index: {}]
  %s1 = inlined_call_operand.hbm [shape: f32[24,128], index: 1, kind: input, shape index: {}]
  %s2 = inlined_call_operand.hbm [shape: f32[2,128], index: 2, kind: output, shape index: {}]
  %s3 = sld [smem:[#allocation0]]
  $region26: #{tpu_custom_call.1} parent=0
    _
  %s5 = ssub.s32 1, %s3
  %s6 = scalar_select 0, %s5, %s3
  $region1: #{tpu_custom_call.1} parent=0
    #allocation2 [shape = 'u8[1024]{0}', space=vmem, size = 0x400, scoped, tag = 'input window, operand 0, single buffered']
    #allocation3 [shape = 's32[1]{0}', space=sflag, size = 0x4, scoped, tag = 'scoped memory for tpu_custom_call.1']
    #allocation4 [shape = 's32[1]{0}', space=sflag, size = 0x4, scoped, tag = 'scoped memory for tpu_custom_call.1']
    #allocation5 [shape = 'u8[12288]{0}', space=vmem, size = 0x3000, scoped, tag = 'input window, operand 1, single buffered']
    #allocation6 [shape = 's32[1]{0}', space=sflag, size = 0x4, scoped, tag = 'scoped memory for tpu_custom_call.1']
    #allocation7 [shape = 'u8[1024]{0}', space=vmem, size = 0x400, scoped, tag = 'output window, operand 0, single buffered']
    %7 = vsyncpa [#allocation3], 0
    %8 = vsyncpa [#allocation6], 0
    %9 = vsyncpa [#allocation4], 0
    // Predicated region
    $region2: #{tpu_custom_call.1} parent=1 // pred_check
      _
    $region3: #{tpu_custom_call.1} parent=1 // pred_check_branch
      %11 = sbr.rel (0) target = $region5
    $region4: #{tpu_custom_call.1} parent=1 // pred_region
      %s13 = ssub.s32 32, 32
      %14 = vsyncadd [#allocation3], %s13
      %s16 = sshll.u32 [#allocation2], 4
      %s17 = int_to_ptr.vmem [resolvable:$true] %s16
      %19 = dma.hbm_to_vmem [thread:$0]  %s0, 32, %s17, [#allocation3]
    $region5: #{tpu_custom_call.1} parent=1 // pred_fallthru
      _
    // Predicated region
    $region6: #{tpu_custom_call.1} parent=1 // pred_check
      _
    $region7: #{tpu_custom_call.1} parent=1 // pred_check_branch
      %21 = sbr.rel (0) target = $region9
    $region8: #{tpu_custom_call.1} parent=1 // pred_region
      %s23 = ssub.s32 384, 384
      %24 = vsyncadd [#allocation6], %s23
      %s25 = sshll.u32 [#allocation5], 4
      %s26 = int_to_ptr.vmem [resolvable:$true] %s25
      %31 = dma.hbm_to_vmem [thread:$0]  %s1, 384, %s26, [#allocation6], 128, 128, 8
    $region9: #{tpu_custom_call.1} parent=1 // pred_fallthru
      _
    // Predicated region
    $region10: #{tpu_custom_call.1} parent=1 // pred_check
      _
    $region11: #{tpu_custom_call.1} parent=1 // pred_check_branch
      %33 = sbr.rel (0) target = $region13
    $region12: #{tpu_custom_call.1} parent=1 // pred_region
      %34 = dma.done [#allocation3], 32
    $region13: #{tpu_custom_call.1} parent=1 // pred_fallthru
      _
    // Predicated region
    $region14: #{tpu_custom_call.1} parent=1 // pred_check
      _
    $region15: #{tpu_custom_call.1} parent=1 // pred_check_branch
      %36 = sbr.rel (0) target = $region17
    $region16: #{tpu_custom_call.1} parent=1 // pred_region
      %37 = dma.done [#allocation6], 384
    $region17: #{tpu_custom_call.1} parent=1 // pred_fallthru
      _
    %v38 = vld [vmem:[#allocation2] sm:$0x3]
    %v39 = vld [vmem:[#allocation5 + $0x4] sm:$0x1]
    %v40 = vld [vmem:[#allocation5] sm:$0x1]
    %42 = vset.pattern.permute.xlu0 0
    %43 = vperm.xlu0 %42, %v38
    %v44 = vpop.permute.xlu0 %43
    %v46 = vlaneseq
    %v47 = vshrl.u32 %v46, 7
    %v48 = vsub.s32 0, %v47
    %v49 = vrot.slane %v40, %v48
    %v50 = vmul.f32 %v44, %v49
    %v51 = vlaneseq
    %v52 = vshrl.u32 %v51, 7
    %v53 = vsub.s32 0, %v52
    %v54 = vrot.slane %v39, %v53
    %v55 = vadd.f32 %v54, %v50
    %v56 = vld [vmem:[#allocation5 + $0x1] sm:$0x1]
    %57 = vset.pattern.permute.xlu0 1
    %58 = vperm.xlu0 %57, %v38
    %v59 = vpop.permute.xlu0 %58
    %v61 = vlaneseq
    %v62 = vshrl.u32 %v61, 7
    %v63 = vsub.s32 0, %v62
    %v64 = vrot.slane %v56, %v63
    %v65 = vmul.f32 %v59, %v64
    %v66 = vadd.f32 %v55, %v65
    %v67 = vld [vmem:[#allocation5 + $0x2] sm:$0x1]
    %68 = vset.pattern.permute.xlu0 2
    %69 = vperm.xlu0 %68, %v38
    %v70 = vpop.permute.xlu0 %69
    %v72 = vlaneseq
    %v73 = vshrl.u32 %v72, 7
    %v74 = vsub.s32 0, %v73
    %v75 = vrot.slane %v67, %v74
    %v76 = vmul.f32 %v70, %v75
    %v77 = vadd.f32 %v66, %v76
    %v78 = vld [vmem:[#allocation5 + $0x3] sm:$0x1]
    %79 = vset.pattern.permute.xlu0 3
    %80 = vperm.xlu0 %79, %v38
    %v81 = vpop.permute.xlu0 %80
    %v83 = vlaneseq
    %v84 = vshrl.u32 %v83, 7
    %v85 = vsub.s32 0, %v84
    %v86 = vrot.slane %v78, %v85
    %v87 = vmul.f32 %v81, %v86
    %v88 = vadd.f32 %v77, %v87
    %v89 = vmax.f32 %v88, 0.0
    %v90 = vld [vmem:[#allocation5 + $0x15] sm:$0x1]
    %v91 = vld [vmem:[#allocation5 + $0x5] sm:$0x1]
    %93 = vset.pattern.permute.xlu0 0
    %94 = vperm.xlu0 %93, %v89
    %v95 = vpop.permute.xlu0 %94
    %v97 = vlaneseq
    %v98 = vshrl.u32 %v97, 7
    %v99 = vsub.s32 0, %v98
    %v100 = vrot.slane %v91, %v99
    %v101 = vmul.f32 %v95, %v100
    %v102 = vlaneseq
    %v103 = vshrl.u32 %v102, 7
    %v104 = vsub.s32 0, %v103
    %v105 = vrot.slane %v90, %v104
    %v106 = vadd.f32 %v105, %v101
    %v107 = vld [vmem:[#allocation5 + $0x6] sm:$0x1]
    %108 = vset.pattern.permute.xlu0 1
    %109 = vperm.xlu0 %108, %v89
    %v110 = vpop.permute.xlu0 %109
    %v112 = vlaneseq
    %v113 = vshrl.u32 %v112, 7
    %v114 = vsub.s32 0, %v113
    %v115 = vrot.slane %v107, %v114
    %v116 = vmul.f32 %v110, %v115
    %v117 = vadd.f32 %v106, %v116
    %v118 = vld [vmem:[#allocation5 + $0x7] sm:$0x1]
    %119 = vset.pattern.permute.xlu0 2
    %120 = vperm.xlu0 %119, %v89
    %v121 = vpop.permute.xlu0 %120
    %v123 = vlaneseq
    %v124 = vshrl.u32 %v123, 7
    %v125 = vsub.s32 0, %v124
    %v126 = vrot.slane %v118, %v125
    %v127 = vmul.f32 %v121, %v126
    %v128 = vadd.f32 %v117, %v127
    %v129 = vld [vmem:[#allocation5 + $0x8] sm:$0x1]
    %130 = vset.pattern.permute.xlu0 3
    %131 = vperm.xlu0 %130, %v89
    %v132 = vpop.permute.xlu0 %131
    %v134 = vlaneseq
    %v135 = vshrl.u32 %v134, 7
    %v136 = vsub.s32 0, %v135
    %v137 = vrot.slane %v129, %v136
    %v138 = vmul.f32 %v132, %v137
    %v139 = vadd.f32 %v128, %v138
    %v140 = vld [vmem:[#allocation5 + $0x9] sm:$0x1]
    %141 = vset.pattern.permute.xlu0 4
    %142 = vperm.xlu0 %141, %v89
    %v143 = vpop.permute.xlu0 %142
    %v145 = vlaneseq
    %v146 = vshrl.u32 %v145, 7
    %v147 = vsub.s32 0, %v146
    %v148 = vrot.slane %v140, %v147
    %v149 = vmul.f32 %v143, %v148
    %v150 = vadd.f32 %v139, %v149
    %v151 = vld [vmem:[#allocation5 + $0xa] sm:$0x1]
    %152 = vset.pattern.permute.xlu0 5
    %153 = vperm.xlu0 %152, %v89
    %v154 = vpop.permute.xlu0 %153
    %v156 = vlaneseq
    %v157 = vshrl.u32 %v156, 7
    %v158 = vsub.s32 0, %v157
    %v159 = vrot.slane %v151, %v158
    %v160 = vmul.f32 %v154, %v159
    %v161 = vadd.f32 %v150, %v160
    %v162 = vld [vmem:[#allocation5 + $0xb] sm:$0x1]
    %163 = vset.pattern.permute.xlu0 6
    %164 = vperm.xlu0 %163, %v89
    %v165 = vpop.permute.xlu0 %164
    %v167 = vlaneseq
    %v168 = vshrl.u32 %v167, 7
    %v169 = vsub.s32 0, %v168
    %v170 = vrot.slane %v162, %v169
    %v171 = vmul.f32 %v165, %v170
    %v172 = vadd.f32 %v161, %v171
    %v173 = vld [vmem:[#allocation5 + $0xc] sm:$0x1]
    %174 = vset.pattern.permute.xlu0 7
    %175 = vperm.xlu0 %174, %v89
    %v176 = vpop.permute.xlu0 %175
    %v178 = vlaneseq
    %v179 = vshrl.u32 %v178, 7
    %v180 = vsub.s32 0, %v179
    %v181 = vrot.slane %v173, %v180
    %v182 = vmul.f32 %v176, %v181
    %v183 = vadd.f32 %v172, %v182
    %v184 = vld [vmem:[#allocation5 + $0xd] sm:$0x1]
    %185 = vset.pattern.permute.xlu0 8
    %186 = vperm.xlu0 %185, %v89
    %v187 = vpop.permute.xlu0 %186
    %v189 = vlaneseq
    %v190 = vshrl.u32 %v189, 7
    %v191 = vsub.s32 0, %v190
    %v192 = vrot.slane %v184, %v191
    %v193 = vmul.f32 %v187, %v192
    %v194 = vadd.f32 %v183, %v193
    %v195 = vld [vmem:[#allocation5 + $0xe] sm:$0x1]
    %196 = vset.pattern.permute.xlu0 9
    %197 = vperm.xlu0 %196, %v89
    %v198 = vpop.permute.xlu0 %197
    %v200 = vlaneseq
    %v201 = vshrl.u32 %v200, 7
    %v202 = vsub.s32 0, %v201
    %v203 = vrot.slane %v195, %v202
    %v204 = vmul.f32 %v198, %v203
    %v205 = vadd.f32 %v194, %v204
    %v206 = vld [vmem:[#allocation5 + $0xf] sm:$0x1]
    %207 = vset.pattern.permute.xlu0 10
    %208 = vperm.xlu0 %207, %v89
    %v209 = vpop.permute.xlu0 %208
    %v211 = vlaneseq
    %v212 = vshrl.u32 %v211, 7
    %v213 = vsub.s32 0, %v212
    %v214 = vrot.slane %v206, %v213
    %v215 = vmul.f32 %v209, %v214
    %v216 = vadd.f32 %v205, %v215
    %v217 = vld [vmem:[#allocation5 + $0x10] sm:$0x1]
    %218 = vset.pattern.permute.xlu0 11
    %219 = vperm.xlu0 %218, %v89
    %v220 = vpop.permute.xlu0 %219
    %v222 = vlaneseq
    %v223 = vshrl.u32 %v222, 7
    %v224 = vsub.s32 0, %v223
    %v225 = vrot.slane %v217, %v224
    %v226 = vmul.f32 %v220, %v225
    %v227 = vadd.f32 %v216, %v226
    %v228 = vld [vmem:[#allocation5 + $0x11] sm:$0x1]
    %229 = vset.pattern.permute.xlu0 12
    %230 = vperm.xlu0 %229, %v89
    %v231 = vpop.permute.xlu0 %230
    %v233 = vlaneseq
    %v234 = vshrl.u32 %v233, 7
    %v235 = vsub.s32 0, %v234
    %v236 = vrot.slane %v228, %v235
    %v237 = vmul.f32 %v231, %v236
    %v238 = vadd.f32 %v227, %v237
    %v239 = vld [vmem:[#allocation5 + $0x12] sm:$0x1]
    %240 = vset.pattern.permute.xlu0 13
    %241 = vperm.xlu0 %240, %v89
    %v242 = vpop.permute.xlu0 %241
    %v244 = vlaneseq
    %v245 = vshrl.u32 %v244, 7
    %v246 = vsub.s32 0, %v245
    %v247 = vrot.slane %v239, %v246
    %v248 = vmul.f32 %v242, %v247
    %v249 = vadd.f32 %v238, %v248
    %v250 = vld [vmem:[#allocation5 + $0x13] sm:$0x1]
    %251 = vset.pattern.permute.xlu0 14
    %252 = vperm.xlu0 %251, %v89
    %v253 = vpop.permute.xlu0 %252
    %v255 = vlaneseq
    %v256 = vshrl.u32 %v255, 7
    %v257 = vsub.s32 0, %v256
    %v258 = vrot.slane %v250, %v257
    %v259 = vmul.f32 %v253, %v258
    %v260 = vadd.f32 %v249, %v259
    %v261 = vld [vmem:[#allocation5 + $0x14] sm:$0x1]
    %262 = vset.pattern.permute.xlu0 15
    %263 = vperm.xlu0 %262, %v89
    %v264 = vpop.permute.xlu0 %263
    %v266 = vlaneseq
    %v267 = vshrl.u32 %v266, 7
    %v268 = vsub.s32 0, %v267
    %v269 = vrot.slane %v261, %v268
    %v270 = vmul.f32 %v264, %v269
    %v271 = vadd.f32 %v260, %v270
    %272 = vst [vmem:[#allocation7] sm:$0x3] %v271
    // Predicated region
    $region18: #{tpu_custom_call.1} parent=1 // pred_check
      _
    $region19: #{tpu_custom_call.1} parent=1 // pred_check_branch
      %274 = sbr.rel (0) target = $region21
    $region20: #{tpu_custom_call.1} parent=1 // pred_region
      %s276 = ssub.s32 32, 32
      %277 = vsyncadd [#allocation4], %s276
      %s279 = sshll.u32 [#allocation7], 4
      %s280 = int_to_ptr.vmem [resolvable:$true] %s279
      %282 = dma.vmem_to_hbm [thread:$0]  %s280, 32, %s2, [#allocation4]
    $region21: #{tpu_custom_call.1} parent=1 // pred_fallthru
      _
    // Predicated region
    $region22: #{tpu_custom_call.1} parent=1 // pred_check
      _
    $region23: #{tpu_custom_call.1} parent=1 // pred_check_branch
      %284 = sbr.rel (0) target = $region25
    $region24: #{tpu_custom_call.1} parent=1 // pred_region
      %285 = dma.done [#allocation4], 32
    $region25: #{tpu_custom_call.1} parent=1 // pred_fallthru
      _
    %286 = vsyncpa [#allocation3], 1
    %287 = vsyncpa [#allocation6], 1
    %288 = vsyncpa [#allocation4], 1

</llo_original>
